<compile_context>
chip_gen: v6e
topology: v6e:2x2x1
jax: 0.10.0
libtpu: 0.0.40
codegen_flags: <defaults>
</compile_context>

<pallas_src>
import jax
import jax.numpy as jnp
from jax.experimental import pallas as pl
from jax.experimental.pallas import tpu as pltpu

IN_DIM = 5 * 19          # 95 logical input features
PAD_IN = 128             # zero-padded K for the first matmul (lane aligned)
OUT_DIM = 2              # logical number of classes
PAD_OUT = 128            # lane-dense output width (wrapper slices [:, :2])
DIMS = [IN_DIM, 128, 64, 64, 32, OUT_DIM]
NEG_SLOPE = 0.01
NEG_FILL = -1e30         # bias fill for padded logit columns -> exp() == 0


def _leaky_relu(x, slope=NEG_SLOPE):
    return jnp.where(x > 0, x, slope * x)


def _round_up(n, m):
    return (n + m - 1) // m * m


def dnn_kernel(x_ref,
               w1_ref, b1_ref, w2_ref, b2_ref, w3_ref, b3_ref,
               w4_ref, b4_ref, w5_ref, b5_ref,
               out_ref):
    # bf16 inputs to the MXU, f32 accumulation + f32 epilogue.
    def linear(h_bf16, w_ref, b_ref):
        return (jnp.dot(h_bf16, w_ref[...], preferred_element_type=jnp.float32)
                + b_ref[...])

    h = x_ref[...]                                               # (TB, 128) bf16
    h = _leaky_relu(linear(h, w1_ref, b1_ref)).astype(jnp.bfloat16)
    h = _leaky_relu(linear(h, w2_ref, b2_ref)).astype(jnp.bfloat16)
    h = _leaky_relu(linear(h, w3_ref, b3_ref)).astype(jnp.bfloat16)
    h = _leaky_relu(linear(h, w4_ref, b4_ref)).astype(jnp.bfloat16)
    logits = linear(h, w5_ref, b5_ref)                           # (TB, 128) f32

    # Softmax over the padded 128-wide class axis: padded columns carry a
    # -1e30 bias so exp() underflows to exactly 0, making this identical to
    # the 2-class softmax while keeping the output store 128 lanes wide.
    m = jnp.max(logits, axis=-1, keepdims=True)
    e = jnp.exp(logits - m)
    s = jnp.sum(e, axis=-1, keepdims=True)
    out_ref[...] = e * pl.reciprocal(s, approx=False)


def init_params(key):
    """PyTorch nn.Linear-style init: U(-1/sqrt(fan_in), 1/sqrt(fan_in)).
    Weights are stored (in, out) so the kernel computes x @ W + b."""
    params = []
    for i in range(5):
        fan_in, fan_out = DIMS[i], DIMS[i + 1]
        key, kw, kb = jax.random.split(key, 3)
        bound = 1.0 / (fan_in ** 0.5)
        w = jax.random.uniform(kw, (fan_in, fan_out), jnp.float32, -bound, bound)
        b = jax.random.uniform(kb, (1, fan_out), jnp.float32, -bound, bound)
        params.append((w, b))
    return params


def pack_params(params):
    """Pad to lane/sublane-friendly shapes, cast weights to bf16 (biases f32)."""
    packed = []
    for i, (w, b) in enumerate(params):
        if i == 0:   # pad K: 95 -> 128 with zero rows
            w = jnp.pad(w, ((0, PAD_IN - IN_DIM), (0, 0)))
        if i == 4:   # pad N: 2 -> 128 with zero cols + very negative bias
            w = jnp.pad(w, ((0, 0), (0, PAD_OUT - OUT_DIM)))
            b = jnp.pad(b, ((0, 0), (0, PAD_OUT - OUT_DIM)),
                        constant_values=NEG_FILL)
        packed.append(w.astype(jnp.bfloat16))
        packed.append(b.astype(jnp.float32))
    return packed


def dnn_forward(x, params, tile_b=1024):
    """Equivalent of DNNModel.forward: x.view(-1, 95) -> probs (batch, 2)."""
    x2d = jnp.reshape(x, (-1, IN_DIM)).astype(jnp.float32)
    batch = x2d.shape[0]

    # Pad features 95 -> 128 and cast to bf16 for the MXU.
    xp = jnp.pad(x2d, ((0, 0), (0, PAD_IN - IN_DIM))).astype(jnp.bfloat16)

    # Batch tile: multiple of 8 sublanes; pad batch to a multiple of the tile.
    tb = min(tile_b, _round_up(batch, 8))
    pb = _round_up(batch, tb)
    if pb != batch:
        xp = jnp.pad(xp, ((0, pb - batch), (0, 0)))

    packed = pack_params(params)
    # Weights/biases: full-array blocks with constant index_map -> resident.
    param_specs = [pl.BlockSpec(p.shape, lambda i: (0, 0)) for p in packed]

    out = pl.pallas_call(
        dnn_kernel,
        out_shape=jax.ShapeDtypeStruct((pb, PAD_OUT), jnp.float32),
        grid=(pb // tb,),
        in_specs=[pl.BlockSpec((tb, PAD_IN), lambda i: (i, 0))] + param_specs,
        out_specs=pl.BlockSpec((tb, PAD_OUT), lambda i: (i, 0)),
        compiler_params=pltpu.CompilerParams(
            dimension_semantics=("parallel",)),
    )(xp, *packed)

    return out[:batch, :OUT_DIM]


def ref_forward(x, params):
    """Pure-JAX f32 reference matching the PyTorch module."""
    h = jnp.reshape(x, (-1, IN_DIM)).astype(jnp.float32)
    for i in range(4):
        w, b = params[i]
        h = _leaky_relu(h @ w + b)
    w, b = params[4]
    return jax.nn.softmax(h @ w + b, axis=1)


if __name__ == "__main__":
    key = jax.random.PRNGKey(0)
    kx, kp, kx2 = jax.random.split(key, 3)

    params = init_params(kp)

    # Small batch, shaped like the PyTorch input before .view(-1, 5*19).
    x = jax.random.normal(kx, (8, 5, 19), jnp.float32)
    out = jax.block_until_ready(dnn_forward(x, params))
    ref = ref_forward(x, params)
    assert out.shape == (8, 2)
    assert jnp.allclose(jnp.sum(out, axis=1), 1.0, atol=1e-5)
    # bf16 matmul inputs (f32 accumulate) -> loosened tolerance vs f32 ref.
    assert jnp.allclose(out, ref, atol=2e-2), float(jnp.max(jnp.abs(out - ref)))

    # Larger, non-tile-multiple batch to exercise the batch grid + padding.
    x2 = jax.random.normal(kx2, (300, 5, 19), jnp.float32)
    out2 = jax.block_until_ready(dnn_forward(x2, params, tile_b=128))
    ref2 = ref_forward(x2, params)
    assert out2.shape == (300, 2)
    assert jnp.allclose(jnp.sum(out2, axis=1), 1.0, atol=1e-5)
    assert jnp.allclose(out2, ref2, atol=2e-2)

    print("KERNEL_OK")
</pallas_src>

<mosaic_0001>
module attributes {stable_mosaic.version = 11 : i64} {
  func.func @dnn_kernel(%arg0: i32, %arg1: memref<8x128xbf16, #tpu.memory_space<vmem>>, %arg2: memref<128x128xbf16, #tpu.memory_space<vmem>>, %arg3: memref<1x128xf32, #tpu.memory_space<vmem>>, %arg4: memref<128x64xbf16, #tpu.memory_space<vmem>>, %arg5: memref<1x64xf32, #tpu.memory_space<vmem>>, %arg6: memref<64x64xbf16, #tpu.memory_space<vmem>>, %arg7: memref<1x64xf32, #tpu.memory_space<vmem>>, %arg8: memref<64x32xbf16, #tpu.memory_space<vmem>>, %arg9: memref<1x32xf32, #tpu.memory_space<vmem>>, %arg10: memref<32x128xbf16, #tpu.memory_space<vmem>>, %arg11: memref<1x128xf32, #tpu.memory_space<vmem>>, %arg12: memref<8x128xf32, #tpu.memory_space<vmem>>) attributes {dimension_semantics = [#tpu.dimension_semantics<parallel>], iteration_bounds = array<i64: 1>, scalar_prefetch = 0 : i64, scratch_operands = 0 : i64, tpu.core_type = #tpu.core_type<tc>, window_params = [{transform_indices = @transform_0, window_bounds = array<i64: 8, 128>}, {pipeline_mode = #tpu.pipeline_mode<synchronous>, transform_indices = @transform_1, window_bounds = array<i64: 128, 128>}, {pipeline_mode = #tpu.pipeline_mode<synchronous>, transform_indices = @transform_2, window_bounds = array<i64: 1, 128>}, {pipeline_mode = #tpu.pipeline_mode<synchronous>, transform_indices = @transform_3, window_bounds = array<i64: 128, 64>}, {pipeline_mode = #tpu.pipeline_mode<synchronous>, transform_indices = @transform_4, window_bounds = array<i64: 1, 64>}, {pipeline_mode = #tpu.pipeline_mode<synchronous>, transform_indices = @transform_5, window_bounds = array<i64: 64, 64>}, {pipeline_mode = #tpu.pipeline_mode<synchronous>, transform_indices = @transform_6, window_bounds = array<i64: 1, 64>}, {pipeline_mode = #tpu.pipeline_mode<synchronous>, transform_indices = @transform_7, window_bounds = array<i64: 64, 32>}, {pipeline_mode = #tpu.pipeline_mode<synchronous>, transform_indices = @transform_8, window_bounds = array<i64: 1, 32>}, {pipeline_mode = #tpu.pipeline_mode<synchronous>, transform_indices = @transform_9, window_bounds = array<i64: 32, 128>}, {pipeline_mode = #tpu.pipeline_mode<synchronous>, transform_indices = @transform_10, window_bounds = array<i64: 1, 128>}, {transform_indices = @transform_11, window_bounds = array<i64: 8, 128>}]} {
    %c0 = arith.constant 0 : index
    %c0_0 = arith.constant 0 : index
    %0 = vector.load %arg1[%c0, %c0_0] : memref<8x128xbf16, #tpu.memory_space<vmem>>, vector<8x128xbf16>
    %c0_1 = arith.constant 0 : index
    %c0_2 = arith.constant 0 : index
    %1 = vector.load %arg2[%c0_1, %c0_2] : memref<128x128xbf16, #tpu.memory_space<vmem>>, vector<128x128xbf16>
    %cst = arith.constant dense<0.000000e+00> : vector<8x128xf32>
    %2 = tpu.matmul %0, %1, %cst {dimension_numbers = #tpu.dot_dimension_numbers<[1], [0], [0], [1], [0, 0, 1, 1], [], []>} : vector<8x128xbf16>, vector<128x128xbf16>, vector<8x128xf32> -> vector<8x128xf32>
    %c0_3 = arith.constant 0 : index
    %c0_4 = arith.constant 0 : index
    %3 = vector.load %arg3[%c0_3, %c0_4] : memref<1x128xf32, #tpu.memory_space<vmem>>, vector<1x128xf32>
    %4 = vector.broadcast %3 : vector<1x128xf32> to vector<8x128xf32>
    %5 = arith.addf %2, %4 : vector<8x128xf32>
    %cst_5 = arith.constant 0.000000e+00 : f32
    %6 = vector.broadcast %cst_5 : f32 to vector<8x128xf32>
    %7 = arith.cmpf ogt, %5, %6 : vector<8x128xf32>
    %cst_6 = arith.constant 0.00999999977 : f32
    %8 = vector.broadcast %cst_6 : f32 to vector<8x128xf32>
    %9 = arith.mulf %8, %5 : vector<8x128xf32>
    %10 = arith.select %7, %5, %9 : vector<8x128xi1>, vector<8x128xf32>
    %11 = arith.truncf %10 : vector<8x128xf32> to vector<8x128xbf16>
    %c0_7 = arith.constant 0 : index
    %c0_8 = arith.constant 0 : index
    %12 = vector.load %arg4[%c0_7, %c0_8] : memref<128x64xbf16, #tpu.memory_space<vmem>>, vector<128x64xbf16>
    %cst_9 = arith.constant dense<0.000000e+00> : vector<8x64xf32>
    %13 = tpu.matmul %11, %12, %cst_9 {dimension_numbers = #tpu.dot_dimension_numbers<[1], [0], [0], [1], [0, 0, 1, 1], [], []>} : vector<8x128xbf16>, vector<128x64xbf16>, vector<8x64xf32> -> vector<8x64xf32>
    %c0_10 = arith.constant 0 : index
    %c0_11 = arith.constant 0 : index
    %14 = vector.load %arg5[%c0_10, %c0_11] : memref<1x64xf32, #tpu.memory_space<vmem>>, vector<1x64xf32>
    %15 = vector.broadcast %14 : vector<1x64xf32> to vector<8x64xf32>
    %16 = arith.addf %13, %15 : vector<8x64xf32>
    %cst_12 = arith.constant 0.000000e+00 : f32
    %17 = vector.broadcast %cst_12 : f32 to vector<8x64xf32>
    %18 = arith.cmpf ogt, %16, %17 : vector<8x64xf32>
    %cst_13 = arith.constant 0.00999999977 : f32
    %19 = vector.broadcast %cst_13 : f32 to vector<8x64xf32>
    %20 = arith.mulf %19, %16 : vector<8x64xf32>
    %21 = arith.select %18, %16, %20 : vector<8x64xi1>, vector<8x64xf32>
    %22 = arith.truncf %21 : vector<8x64xf32> to vector<8x64xbf16>
    %c0_14 = arith.constant 0 : index
    %c0_15 = arith.constant 0 : index
    %23 = vector.load %arg6[%c0_14, %c0_15] : memref<64x64xbf16, #tpu.memory_space<vmem>>, vector<64x64xbf16>
    %cst_16 = arith.constant dense<0.000000e+00> : vector<8x64xf32>
    %24 = tpu.matmul %22, %23, %cst_16 {dimension_numbers = #tpu.dot_dimension_numbers<[1], [0], [0], [1], [0, 0, 1, 1], [], []>} : vector<8x64xbf16>, vector<64x64xbf16>, vector<8x64xf32> -> vector<8x64xf32>
    %c0_17 = arith.constant 0 : index
    %c0_18 = arith.constant 0 : index
    %25 = vector.load %arg7[%c0_17, %c0_18] : memref<1x64xf32, #tpu.memory_space<vmem>>, vector<1x64xf32>
    %26 = vector.broadcast %25 : vector<1x64xf32> to vector<8x64xf32>
    %27 = arith.addf %24, %26 : vector<8x64xf32>
    %cst_19 = arith.constant 0.000000e+00 : f32
    %28 = vector.broadcast %cst_19 : f32 to vector<8x64xf32>
    %29 = arith.cmpf ogt, %27, %28 : vector<8x64xf32>
    %cst_20 = arith.constant 0.00999999977 : f32
    %30 = vector.broadcast %cst_20 : f32 to vector<8x64xf32>
    %31 = arith.mulf %30, %27 : vector<8x64xf32>
    %32 = arith.select %29, %27, %31 : vector<8x64xi1>, vector<8x64xf32>
    %33 = arith.truncf %32 : vector<8x64xf32> to vector<8x64xbf16>
    %c0_21 = arith.constant 0 : index
    %c0_22 = arith.constant 0 : index
    %34 = vector.load %arg8[%c0_21, %c0_22] : memref<64x32xbf16, #tpu.memory_space<vmem>>, vector<64x32xbf16>
    %cst_23 = arith.constant dense<0.000000e+00> : vector<8x32xf32>
    %35 = tpu.matmul %33, %34, %cst_23 {dimension_numbers = #tpu.dot_dimension_numbers<[1], [0], [0], [1], [0, 0, 1, 1], [], []>} : vector<8x64xbf16>, vector<64x32xbf16>, vector<8x32xf32> -> vector<8x32xf32>
    %c0_24 = arith.constant 0 : index
    %c0_25 = arith.constant 0 : index
    %36 = vector.load %arg9[%c0_24, %c0_25] : memref<1x32xf32, #tpu.memory_space<vmem>>, vector<1x32xf32>
    %37 = vector.broadcast %36 : vector<1x32xf32> to vector<8x32xf32>
    %38 = arith.addf %35, %37 : vector<8x32xf32>
    %cst_26 = arith.constant 0.000000e+00 : f32
    %39 = vector.broadcast %cst_26 : f32 to vector<8x32xf32>
    %40 = arith.cmpf ogt, %38, %39 : vector<8x32xf32>
    %cst_27 = arith.constant 0.00999999977 : f32
    %41 = vector.broadcast %cst_27 : f32 to vector<8x32xf32>
    %42 = arith.mulf %41, %38 : vector<8x32xf32>
    %43 = arith.select %40, %38, %42 : vector<8x32xi1>, vector<8x32xf32>
    %44 = arith.truncf %43 : vector<8x32xf32> to vector<8x32xbf16>
    %c0_28 = arith.constant 0 : index
    %c0_29 = arith.constant 0 : index
    %45 = vector.load %arg10[%c0_28, %c0_29] : memref<32x128xbf16, #tpu.memory_space<vmem>>, vector<32x128xbf16>
    %cst_30 = arith.constant dense<0.000000e+00> : vector<8x128xf32>
    %46 = tpu.matmul %44, %45, %cst_30 {dimension_numbers = #tpu.dot_dimension_numbers<[1], [0], [0], [1], [0, 0, 1, 1], [], []>} : vector<8x32xbf16>, vector<32x128xbf16>, vector<8x128xf32> -> vector<8x128xf32>
    %c0_31 = arith.constant 0 : index
    %c0_32 = arith.constant 0 : index
    %47 = vector.load %arg11[%c0_31, %c0_32] : memref<1x128xf32, #tpu.memory_space<vmem>>, vector<1x128xf32>
    %48 = vector.broadcast %47 : vector<1x128xf32> to vector<8x128xf32>
    %49 = arith.addf %46, %48 : vector<8x128xf32>
    %cst_33 = arith.constant dense<0xFF800000> : vector<8xf32>
    %50 = vector.multi_reduction <maximumf>, %49, %cst_33 [1] : vector<8x128xf32> to vector<8xf32>
    %51 = vector.shape_cast %50 : vector<8xf32> to vector<8x1xf32>
    %52 = vector.broadcast %51 : vector<8x1xf32> to vector<8x128xf32>
    %53 = arith.subf %49, %52 : vector<8x128xf32>
    %54 = math.exp %53 : vector<8x128xf32>
    %cst_34 = arith.constant dense<0.000000e+00> : vector<8xf32>
    %55 = vector.multi_reduction <add>, %54, %cst_34 [1] : vector<8x128xf32> to vector<8xf32>
    %56 = vector.shape_cast %55 : vector<8xf32> to vector<8x1xf32>
    %57 = tpu.reciprocal %56 : vector<8x1xf32> -> vector<8x1xf32>
    %58 = vector.broadcast %57 : vector<8x1xf32> to vector<8x128xf32>
    %59 = arith.mulf %54, %58 : vector<8x128xf32>
    %c0_35 = arith.constant 0 : index
    %c0_36 = arith.constant 0 : index
    %60 = vector.load %arg12[%c0_35, %c0_36] : memref<8x128xf32, #tpu.memory_space<vmem>>, vector<8x128xf32>
    tpu.vector_store %arg12[%c0_35, %c0_36], %59 {strides = array<i32>} : memref<8x128xf32, #tpu.memory_space<vmem>>, vector<8x128xf32>,
    return
  }
  func.func @transform_0(%arg0: i32) -> (i32, i32) {
    %c0_i32 = arith.constant 0 : i32
    %c0_i32_0 = arith.constant 0 : i32
    return %arg0, %c0_i32 : i32, i32
  }
  func.func @transform_1(%arg0: i32) -> (i32, i32) {
    %c0_i32 = arith.constant 0 : i32
    %c0_i32_0 = arith.constant 0 : i32
    %c0_i32_1 = arith.constant 0 : i32
    return %c0_i32, %c0_i32_0 : i32, i32
  }
  func.func @transform_2(%arg0: i32) -> (i32, i32) {
    %c0_i32 = arith.constant 0 : i32
    %c0_i32_0 = arith.constant 0 : i32
    %c0_i32_1 = arith.constant 0 : i32
    return %c0_i32, %c0_i32_0 : i32, i32
  }
  func.func @transform_3(%arg0: i32) -> (i32, i32) {
    %c0_i32 = arith.constant 0 : i32
    %c0_i32_0 = arith.constant 0 : i32
    %c0_i32_1 = arith.constant 0 : i32
    return %c0_i32, %c0_i32_0 : i32, i32
  }
  func.func @transform_4(%arg0: i32) -> (i32, i32) {
    %c0_i32 = arith.constant 0 : i32
    %c0_i32_0 = arith.constant 0 : i32
    %c0_i32_1 = arith.constant 0 : i32
    return %c0_i32, %c0_i32_0 : i32, i32
  }
  func.func @transform_5(%arg0: i32) -> (i32, i32) {
    %c0_i32 = arith.constant 0 : i32
    %c0_i32_0 = arith.constant 0 : i32
    %c0_i32_1 = arith.constant 0 : i32
    return %c0_i32, %c0_i32_0 : i32, i32
  }
  func.func @transform_6(%arg0: i32) -> (i32, i32) {
    %c0_i32 = arith.constant 0 : i32
    %c0_i32_0 = arith.constant 0 : i32
    %c0_i32_1 = arith.constant 0 : i32
    return %c0_i32, %c0_i32_0 : i32, i32
  }
  func.func @transform_7(%arg0: i32) -> (i32, i32) {
    %c0_i32 = arith.constant 0 : i32
    %c0_i32_0 = arith.constant 0 : i32
    %c0_i32_1 = arith.constant 0 : i32
    return %c0_i32, %c0_i32_0 : i32, i32
  }
  func.func @transform_8(%arg0: i32) -> (i32, i32) {
    %c0_i32 = arith.constant 0 : i32
    %c0_i32_0 = arith.constant 0 : i32
    %c0_i32_1 = arith.constant 0 : i32
    return %c0_i32, %c0_i32_0 : i32, i32
  }
  func.func @transform_9(%arg0: i32) -> (i32, i32) {
    %c0_i32 = arith.constant 0 : i32
    %c0_i32_0 = arith.constant 0 : i32
    %c0_i32_1 = arith.constant 0 : i32
    return %c0_i32, %c0_i32_0 : i32, i32
  }
  func.func @transform_10(%arg0: i32) -> (i32, i32) {
    %c0_i32 = arith.constant 0 : i32
    %c0_i32_0 = arith.constant 0 : i32
    %c0_i32_1 = arith.constant 0 : i32
    return %c0_i32, %c0_i32_0 : i32, i32
  }
  func.func @transform_11(%arg0: i32) -> (i32, i32) {
    %c0_i32 = arith.constant 0 : i32
    %c0_i32_0 = arith.constant 0 : i32
    return %arg0, %c0_i32 : i32, i32
  }
}

</mosaic_0001>

<llo_original>
// kernel: tpu_custom_call.1
$region0: #{tpu_custom_call.1}
  #allocation0 [shape = 'u32[]', space=smem, size = 0x4, offset = 0x4, fixed_abs, tag = 'smem constant byte address 0x4 - core index']
  #allocation1 [shape = 'u32[144,128]{1,0:T(1,128)}', space=vmem, size = 0x12000, scoped, tag = 'internal scratch']
  %s0 = inlined_call_operand.vmem [shape: bf16[8,128], index: 0, kind: input, shape index: {}]
  %s1 = inlined_call_operand.vmem [shape: bf16[128,128], index: 1, kind: input, shape index: {}]
  %s2 = inlined_call_operand.vmem [shape: f32[1,128], index: 2, kind: input, shape index: {}]
  %s3 = inlined_call_operand.vmem [shape: bf16[128,64], index: 3, kind: input, shape index: {}]
  %s4 = inlined_call_operand.vmem [shape: f32[1,64], index: 4, kind: input, shape index: {}]
  %s5 = inlined_call_operand.vmem [shape: bf16[64,64], index: 5, kind: input, shape index: {}]
  %s6 = inlined_call_operand.vmem [shape: f32[1,64], index: 6, kind: input, shape index: {}]
  %s7 = inlined_call_operand.vmem [shape: bf16[64,32], index: 7, kind: input, shape index: {}]
  %s8 = inlined_call_operand.vmem [shape: f32[1,32], index: 8, kind: input, shape index: {}]
  %s9 = inlined_call_operand.vmem [shape: bf16[32,128], index: 9, kind: input, shape index: {}]
  %s10 = inlined_call_operand.vmem [shape: f32[1,128], index: 10, kind: input, shape index: {}]
  %s11 = inlined_call_operand.hbm [shape: f32[8,128], index: 11, kind: output, shape index: {}]
  %s12 = sld [smem:[#allocation0]]
  $region54: #{tpu_custom_call.1} parent=0
    _
  %s14 = ssub.s32 1, %s12
  %s15 = scalar_select 0, %s14, %s12
  $region1: #{tpu_custom_call.1} parent=0
    #allocation2 [shape = 'u8[4096]{0}', space=vmem, size = 0x1000, scoped, tag = 'output window, operand 0, single buffered']
    #allocation3 [shape = 's32[1]{0}', space=sflag, size = 0x4, scoped, tag = 'scoped memory for tpu_custom_call.1']
    %16 = vsyncpa [#allocation3], 0
    // Predicated region
    $region2: #{tpu_custom_call.1} parent=1 // pred_check
      _
    $region3: #{tpu_custom_call.1} parent=1 // pred_check_branch
      %18 = sbr.rel (0) target = $region5
    $region4: #{tpu_custom_call.1} parent=1 // pred_region
      _
    $region5: #{tpu_custom_call.1} parent=1 // pred_fallthru
      _
    // Predicated region
    $region6: #{tpu_custom_call.1} parent=1 // pred_check
      _
    $region7: #{tpu_custom_call.1} parent=1 // pred_check_branch
      %20 = sbr.rel (0) target = $region9
    $region8: #{tpu_custom_call.1} parent=1 // pred_region
      _
    $region9: #{tpu_custom_call.1} parent=1 // pred_fallthru
      _
    // Predicated region
    $region10: #{tpu_custom_call.1} parent=1 // pred_check
      _
    $region11: #{tpu_custom_call.1} parent=1 // pred_check_branch
      %22 = sbr.rel (0) target = $region13
    $region12: #{tpu_custom_call.1} parent=1 // pred_region
      _
    $region13: #{tpu_custom_call.1} parent=1 // pred_fallthru
      _
    // Predicated region
    $region14: #{tpu_custom_call.1} parent=1 // pred_check
      _
    $region15: #{tpu_custom_call.1} parent=1 // pred_check_branch
      %24 = sbr.rel (0) target = $region17
    $region16: #{tpu_custom_call.1} parent=1 // pred_region
      _
    $region17: #{tpu_custom_call.1} parent=1 // pred_fallthru
      _
    // Predicated region
    $region18: #{tpu_custom_call.1} parent=1 // pred_check
      _
    $region19: #{tpu_custom_call.1} parent=1 // pred_check_branch
      %26 = sbr.rel (0) target = $region21
    $region20: #{tpu_custom_call.1} parent=1 // pred_region
      _
    $region21: #{tpu_custom_call.1} parent=1 // pred_fallthru
      _
    // Predicated region
    $region22: #{tpu_custom_call.1} parent=1 // pred_check
      _
    $region23: #{tpu_custom_call.1} parent=1 // pred_check_branch
      %28 = sbr.rel (0) target = $region25
    $region24: #{tpu_custom_call.1} parent=1 // pred_region
      _
    $region25: #{tpu_custom_call.1} parent=1 // pred_fallthru
      _
    // Predicated region
    $region26: #{tpu_custom_call.1} parent=1 // pred_check
      _
    $region27: #{tpu_custom_call.1} parent=1 // pred_check_branch
      %30 = sbr.rel (0) target = $region29
    $region28: #{tpu_custom_call.1} parent=1 // pred_region
      _
    $region29: #{tpu_custom_call.1} parent=1 // pred_fallthru
      _
    // Predicated region
    $region30: #{tpu_custom_call.1} parent=1 // pred_check
      _
    $region31: #{tpu_custom_call.1} parent=1 // pred_check_branch
      %32 = sbr.rel (0) target = $region33
    $region32: #{tpu_custom_call.1} parent=1 // pred_region
      _
    $region33: #{tpu_custom_call.1} parent=1 // pred_fallthru
      _
    // Predicated region
    $region34: #{tpu_custom_call.1} parent=1 // pred_check
      _
    $region35: #{tpu_custom_call.1} parent=1 // pred_check_branch
      %34 = sbr.rel (0) target = $region37
    $region36: #{tpu_custom_call.1} parent=1 // pred_region
      _
    $region37: #{tpu_custom_call.1} parent=1 // pred_fallthru
      _
    // Predicated region
    $region38: #{tpu_custom_call.1} parent=1 // pred_check
      _
    $region39: #{tpu_custom_call.1} parent=1 // pred_check_branch
      %36 = sbr.rel (0) target = $region41
    $region40: #{tpu_custom_call.1} parent=1 // pred_region
      _
    $region41: #{tpu_custom_call.1} parent=1 // pred_fallthru
      _
    // Predicated region
    $region42: #{tpu_custom_call.1} parent=1 // pred_check
      _
    $region43: #{tpu_custom_call.1} parent=1 // pred_check_branch
      %38 = sbr.rel (0) target = $region45
    $region44: #{tpu_custom_call.1} parent=1 // pred_region
      _
    $region45: #{tpu_custom_call.1} parent=1 // pred_fallthru
      _
    %v40 = vld [vmem:[%s0] sm:$0xf]
    %v41 = vld [vmem:[%s1] sm:$0xf]
    %v42 = vld [vmem:[%s1 + $0x4] sm:$0xf]
    %v43 = vld [vmem:[%s1 + $0x8] sm:$0xf]
    %v44 = vld [vmem:[%s1 + $0xc] sm:$0xf]
    %v45 = vld [vmem:[%s1 + $0x10] sm:$0xf]
    %v46 = vld [vmem:[%s1 + $0x14] sm:$0xf]
    %v47 = vld [vmem:[%s1 + $0x18] sm:$0xf]
    %v48 = vld [vmem:[%s1 + $0x1c] sm:$0xf]
    %v49 = vld [vmem:[%s1 + $0x20] sm:$0xf]
    %v50 = vld [vmem:[%s1 + $0x24] sm:$0xf]
    %v51 = vld [vmem:[%s1 + $0x28] sm:$0xf]
    %v52 = vld [vmem:[%s1 + $0x2c] sm:$0xf]
    %v53 = vld [vmem:[%s1 + $0x30] sm:$0xf]
    %v54 = vld [vmem:[%s1 + $0x34] sm:$0xf]
    %v55 = vld [vmem:[%s1 + $0x38] sm:$0xf]
    %v56 = vld [vmem:[%s1 + $0x3c] sm:$0xf]
    %v57 = vld [vmem:[%s2] sm:$0x1]
    %v59 = vlaneseq
    %v60 = vshrl.u32 %v59, 7
    %v61 = vsub.s32 0, %v60
    %v62 = vrot.slane %v57, %v61
    %v80 = vunpack.c.l.b16 %v41
    %v81 = vunpack.c.l.b16 %v42
    %v82 = vunpack.c.l.b16 %v43
    %v83 = vunpack.c.l.b16 %v44
    %v84 = vunpack.c.l.b16 %v45
    %v85 = vunpack.c.l.b16 %v46
    %v86 = vunpack.c.l.b16 %v47
    %v87 = vunpack.c.l.b16 %v48
    %v88 = vunpack.c.l.b16 %v49
    %v89 = vunpack.c.l.b16 %v50
    %v90 = vunpack.c.l.b16 %v51
    %v91 = vunpack.c.l.b16 %v52
    %v92 = vunpack.c.l.b16 %v53
    %v93 = vunpack.c.l.b16 %v54
    %v94 = vunpack.c.l.b16 %v55
    %v95 = vunpack.c.l.b16 %v56
    %v96 = vpack.c.b16 %v81, %v80
    %v97 = vpack.c.b16 %v83, %v82
    %v98 = vpack.c.b16 %v85, %v84
    %v99 = vpack.c.b16 %v87, %v86
    %v100 = vpack.c.b16 %v89, %v88
    %v101 = vpack.c.b16 %v91, %v90
    %v102 = vpack.c.b16 %v93, %v92
    %v103 = vpack.c.b16 %v95, %v94
    %112 = vmatprep.subr.bf16.mxu0 0
    %113 = vmatpush1.bf16.msra.mxu0 %v103
    %114 = vmatprep.subr.bf16.mxu0 0
    %115 = vmatpush1.bf16.msra.mxu0 %v102
    %116 = vmatprep.subr.bf16.mxu0 0
    %117 = vmatpush1.bf16.msra.mxu0 %v101
    %118 = vmatprep.subr.bf16.mxu0 0
    %119 = vmatpush1.bf16.msra.mxu0 %v100
    %120 = vmatprep.subr.bf16.mxu0 0
    %121 = vmatpush1.bf16.msra.mxu0 %v99
    %122 = vmatprep.subr.bf16.mxu0 0
    %123 = vmatpush1.bf16.msra.mxu0 %v98
    %124 = vmatprep.subr.bf16.mxu0 0
    %125 = vmatpush1.bf16.msra.mxu0 %v97
    %126 = vmatprep.subr.bf16.mxu0 0
    %127 = vmatpush1.bf16.msra.mxu0 %v96
    %128 = vmatprep.subr.bf16.mxu0 0
    %129 = vmatpush2.bf16.msra.mxu0 0
    %130 = vmatprep.subr.bf16.mxu0 0
    %131 = vmatpush2.bf16.msra.mxu0 0
    %132 = vmatprep.subr.bf16.mxu0 0
    %133 = vmatpush2.bf16.msra.mxu0 0
    %134 = vmatprep.subr.bf16.mxu0 0
    %135 = vmatpush2.bf16.msra.mxu0 0
    %136 = vmatprep.subr.bf16.mxu0 0
    %137 = vmatpush2.bf16.msra.mxu0 0
    %138 = vmatprep.subr.bf16.mxu0 0
    %139 = vmatpush2.bf16.msra.mxu0 0
    %140 = vmatprep.subr.bf16.mxu0 0
    %141 = vmatpush2.bf16.msra.mxu0 0
    %142 = vmatprep.subr.bf16.mxu0 0
    %143 = vmatpush2.bf16.msra.mxu0 0
    %144 = vmatprep.mubr.bf16.mxu0 0
    %145 = vmatmul.mubr.bf16.gmra.mxu0 %v40
    %v146 = vpop.f32.mrf.mxu0
    %v147 = vadd.f32 %v62, %v146
    %v148 = vpop.f32.mrf.mxu0
    %v149 = vpop.f32.mrf.mxu0
    %v150 = vpop.f32.mrf.mxu0
    %151 = vdwg.mxu0
    %vm152 = vcmp.gt.f32.partialorder %v147, 0.0
    %v153 = vmul.f32 %v147, 0.01
    %v154 = vsel %vm152, %v147, %v153
    %v155 = vpack.c.bf16 %v154, %v154
    %v156 = vld [vmem:[%s3] sm:$0xf]
    %v157 = vld [vmem:[%s3 + $0x4] sm:$0xf]
    %v158 = vld [vmem:[%s3 + $0x8] sm:$0xf]
    %v159 = vld [vmem:[%s3 + $0xc] sm:$0xf]
    %v160 = vld [vmem:[%s3 + $0x10] sm:$0xf]
    %v161 = vld [vmem:[%s3 + $0x14] sm:$0xf]
    %v162 = vld [vmem:[%s3 + $0x18] sm:$0xf]
    %v163 = vld [vmem:[%s3 + $0x1c] sm:$0xf]
    %v164 = vld [vmem:[%s3 + $0x20] sm:$0xf]
    %v165 = vld [vmem:[%s3 + $0x24] sm:$0xf]
    %v166 = vld [vmem:[%s3 + $0x28] sm:$0xf]
    %v167 = vld [vmem:[%s3 + $0x2c] sm:$0xf]
    %v168 = vld [vmem:[%s3 + $0x30] sm:$0xf]
    %v169 = vld [vmem:[%s3 + $0x34] sm:$0xf]
    %v170 = vld [vmem:[%s3 + $0x38] sm:$0xf]
    %v171 = vld [vmem:[%s3 + $0x3c] sm:$0xf]
    %v172 = vld [vmem:[%s4] sm:$0x1]
    %v174 = vlaneseq
    %v175 = vshrl.u32 %v174, 7
    %v176 = vsub.s32 0, %v175
    %v177 = vrot.slane %v172, %v176
    %v195 = vunpack.c.l.b16 %v156
    %v196 = vunpack.c.l.b16 %v157
    %v197 = vunpack.c.l.b16 %v158
    %v198 = vunpack.c.l.b16 %v159
    %v199 = vunpack.c.l.b16 %v160
    %v200 = vunpack.c.l.b16 %v161
    %v201 = vunpack.c.l.b16 %v162
    %v202 = vunpack.c.l.b16 %v163
    %v203 = vunpack.c.l.b16 %v164
    %v204 = vunpack.c.l.b16 %v165
    %v205 = vunpack.c.l.b16 %v166
    %v206 = vunpack.c.l.b16 %v167
    %v207 = vunpack.c.l.b16 %v168
    %v208 = vunpack.c.l.b16 %v169
    %v209 = vunpack.c.l.b16 %v170
    %v210 = vunpack.c.l.b16 %v171
    %v211 = vpack.c.b16 %v196, %v195
    %v212 = vpack.c.b16 %v198, %v197
    %v213 = vpack.c.b16 %v200, %v199
    %v214 = vpack.c.b16 %v202, %v201
    %v215 = vpack.c.b16 %v204, %v203
    %v216 = vpack.c.b16 %v206, %v205
    %v217 = vpack.c.b16 %v208, %v207
    %v218 = vpack.c.b16 %v210, %v209
    %227 = vmatprep.subr.bf16.mxu0 0
    %228 = vmatpush1.bf16.msra.mxu0 %v218
    %229 = vmatprep.subr.bf16.mxu0 0
    %230 = vmatpush1.bf16.msra.mxu0 %v217
    %231 = vmatprep.subr.bf16.mxu0 0
    %232 = vmatpush1.bf16.msra.mxu0 %v216
    %233 = vmatprep.subr.bf16.mxu0 0
    %234 = vmatpush1.bf16.msra.mxu0 %v215
    %235 = vmatprep.subr.bf16.mxu0 0
    %236 = vmatpush1.bf16.msra.mxu0 %v214
    %237 = vmatprep.subr.bf16.mxu0 0
    %238 = vmatpush1.bf16.msra.mxu0 %v213
    %239 = vmatprep.subr.bf16.mxu0 0
    %240 = vmatpush1.bf16.msra.mxu0 %v212
    %241 = vmatprep.subr.bf16.mxu0 0
    %242 = vmatpush1.bf16.msra.mxu0 %v211
    %243 = vmatprep.subr.bf16.mxu0 0
    %244 = vmatpush2.bf16.msra.mxu0 0
    %245 = vmatprep.subr.bf16.mxu0 0
    %246 = vmatpush2.bf16.msra.mxu0 0
    %247 = vmatprep.subr.bf16.mxu0 0
    %248 = vmatpush2.bf16.msra.mxu0 0
    %249 = vmatprep.subr.bf16.mxu0 0
    %250 = vmatpush2.bf16.msra.mxu0 0
    %251 = vmatprep.subr.bf16.mxu0 0
    %252 = vmatpush2.bf16.msra.mxu0 0
    %253 = vmatprep.subr.bf16.mxu0 0
    %254 = vmatpush2.bf16.msra.mxu0 0
    %255 = vmatprep.subr.bf16.mxu0 0
    %256 = vmatpush2.bf16.msra.mxu0 0
    %257 = vmatprep.subr.bf16.mxu0 0
    %258 = vmatpush2.bf16.msra.mxu0 0
    %259 = vmatprep.mubr.bf16.mxu0 0
    %260 = vmatmul.mubr.bf16.gmra.mxu0 %v155
    %v261 = vpop.f32.mrf.mxu0
    %v262 = vadd.f32 %v177, %v261
    %v263 = vpop.f32.mrf.mxu0
    %v264 = vpop.f32.mrf.mxu0
    %v265 = vpop.f32.mrf.mxu0
    %266 = vdwg.mxu0
    %vm267 = vcmp.gt.f32.partialorder %v262, 0.0
    %v268 = vmul.f32 %v262, 0.01
    %v269 = vsel %vm267, %v262, %v268
    %v270 = vpack.c.bf16 %v269, %v269
    %v271 = vld [vmem:[%s5] sm:$0xf]
    %v272 = vld [vmem:[%s5 + $0x4] sm:$0xf]
    %v273 = vld [vmem:[%s5 + $0x8] sm:$0xf]
    %v274 = vld [vmem:[%s5 + $0xc] sm:$0xf]
    %v275 = vld [vmem:[%s5 + $0x10] sm:$0xf]
    %v276 = vld [vmem:[%s5 + $0x14] sm:$0xf]
    %v277 = vld [vmem:[%s5 + $0x18] sm:$0xf]
    %v278 = vld [vmem:[%s5 + $0x1c] sm:$0xf]
    %v279 = vld [vmem:[%s6] sm:$0x1]
    %v281 = vlaneseq
    %v282 = vshrl.u32 %v281, 7
    %v283 = vsub.s32 0, %v282
    %v284 = vrot.slane %v279, %v283
    %v294 = vunpack.c.l.b16 %v271
    %v295 = vunpack.c.l.b16 %v272
    %v296 = vunpack.c.l.b16 %v273
    %v297 = vunpack.c.l.b16 %v274
    %v298 = vunpack.c.l.b16 %v275
    %v299 = vunpack.c.l.b16 %v276
    %v300 = vunpack.c.l.b16 %v277
    %v301 = vunpack.c.l.b16 %v278
    %v302 = vpack.c.b16 %v295, %v294
    %v303 = vpack.c.b16 %v297, %v296
    %v304 = vpack.c.b16 %v299, %v298
    %v305 = vpack.c.b16 %v301, %v300
    %vm310 = vcmask 523264
    %v312 = vsel %vm310, %v270, 0
    %314 = vmatprep.subr.bf16.mxu0 0
    %315 = vmatpush1.bf16.msra.mxu0 0
    %316 = vmatprep.subr.bf16.mxu0 0
    %317 = vmatpush1.bf16.msra.mxu0 0
    %318 = vmatprep.subr.bf16.mxu0 0
    %319 = vmatpush1.bf16.msra.mxu0 0
    %320 = vmatprep.subr.bf16.mxu0 0
    %321 = vmatpush1.bf16.msra.mxu0 0
    %322 = vmatprep.subr.bf16.mxu0 0
    %323 = vmatpush1.bf16.msra.mxu0 %v305
    %324 = vmatprep.subr.bf16.mxu0 0
    %325 = vmatpush1.bf16.msra.mxu0 %v304
    %326 = vmatprep.subr.bf16.mxu0 0
    %327 = vmatpush1.bf16.msra.mxu0 %v303
    %328 = vmatprep.subr.bf16.mxu0 0
    %329 = vmatpush1.bf16.msra.mxu0 %v302
    %330 = vmatprep.subr.bf16.mxu0 0
    %331 = vmatpush2.bf16.msra.mxu0 0
    %332 = vmatprep.subr.bf16.mxu0 0
    %333 = vmatpush2.bf16.msra.mxu0 0
    %334 = vmatprep.subr.bf16.mxu0 0
    %335 = vmatpush2.bf16.msra.mxu0 0
    %336 = vmatprep.subr.bf16.mxu0 0
    %337 = vmatpush2.bf16.msra.mxu0 0
    %338 = vmatprep.subr.bf16.mxu0 0
    %339 = vmatpush2.bf16.msra.mxu0 0
    %340 = vmatprep.subr.bf16.mxu0 0
    %341 = vmatpush2.bf16.msra.mxu0 0
    %342 = vmatprep.subr.bf16.mxu0 0
    %343 = vmatpush2.bf16.msra.mxu0 0
    %344 = vmatprep.subr.bf16.mxu0 0
    %345 = vmatpush2.bf16.msra.mxu0 0
    %346 = vmatprep.mubr.bf16.mxu0 0
    %347 = vmatmul.mubr.bf16.gmra.mxu0 %v312
    %v348 = vpop.f32.mrf.mxu0
    %v349 = vadd.f32 %v284, %v348
    %v350 = vpop.f32.mrf.mxu0
    %v351 = vpop.f32.mrf.mxu0
    %v352 = vpop.f32.mrf.mxu0
    %353 = vdwg.mxu0
    %vm354 = vcmp.gt.f32.partialorder %v349, 0.0
    %v355 = vmul.f32 %v349, 0.01
    %v356 = vsel %vm354, %v349, %v355
    %v357 = vpack.c.bf16 %v356, %v356
    %v358 = vld [vmem:[%s7] sm:$0xf]
    %v359 = vld [vmem:[%s7 + $0x4] sm:$0xf]
    %v360 = vld [vmem:[%s7 + $0x8] sm:$0xf]
    %v361 = vld [vmem:[%s7 + $0xc] sm:$0xf]
    %v362 = vld [vmem:[%s7 + $0x10] sm:$0xf]
    %v363 = vld [vmem:[%s7 + $0x14] sm:$0xf]
    %v364 = vld [vmem:[%s7 + $0x18] sm:$0xf]
    %v365 = vld [vmem:[%s7 + $0x1c] sm:$0xf]
    %v366 = vld [vmem:[%s8] sm:$0x1]
    %v368 = vlaneseq
    %v369 = vshrl.u32 %v368, 7
    %v370 = vsub.s32 0, %v369
    %v371 = vrot.slane %v366, %v370
    %v381 = vunpack.c.l.b16 %v358
    %v382 = vunpack.c.l.b16 %v359
    %v383 = vunpack.c.l.b16 %v360
    %v384 = vunpack.c.l.b16 %v361
    %v385 = vunpack.c.l.b16 %v362
    %v386 = vunpack.c.l.b16 %v363
    %v387 = vunpack.c.l.b16 %v364
    %v388 = vunpack.c.l.b16 %v365
    %v389 = vpack.c.b16 %v382, %v381
    %v390 = vpack.c.b16 %v384, %v383
    %v391 = vpack.c.b16 %v386, %v385
    %v392 = vpack.c.b16 %v388, %v387
    %v398 = vsel %vm310, %v357, 0
    %400 = vmatprep.subr.bf16.mxu0 0
    %401 = vmatpush1.bf16.msra.mxu0 0
    %402 = vmatprep.subr.bf16.mxu0 0
    %403 = vmatpush1.bf16.msra.mxu0 0
    %404 = vmatprep.subr.bf16.mxu0 0
    %405 = vmatpush1.bf16.msra.mxu0 0
    %406 = vmatprep.subr.bf16.mxu0 0
    %407 = vmatpush1.bf16.msra.mxu0 0
    %408 = vmatprep.subr.bf16.mxu0 0
    %409 = vmatpush1.bf16.msra.mxu0 %v392
    %410 = vmatprep.subr.bf16.mxu0 0
    %411 = vmatpush1.bf16.msra.mxu0 %v391
    %412 = vmatprep.subr.bf16.mxu0 0
    %413 = vmatpush1.bf16.msra.mxu0 %v390
    %414 = vmatprep.subr.bf16.mxu0 0
    %415 = vmatpush1.bf16.msra.mxu0 %v389
    %416 = vmatprep.subr.bf16.mxu0 0
    %417 = vmatpush2.bf16.msra.mxu0 0
    %418 = vmatprep.subr.bf16.mxu0 0
    %419 = vmatpush2.bf16.msra.mxu0 0
    %420 = vmatprep.subr.bf16.mxu0 0
    %421 = vmatpush2.bf16.msra.mxu0 0
    %422 = vmatprep.subr.bf16.mxu0 0
    %423 = vmatpush2.bf16.msra.mxu0 0
    %424 = vmatprep.subr.bf16.mxu0 0
    %425 = vmatpush2.bf16.msra.mxu0 0
    %426 = vmatprep.subr.bf16.mxu0 0
    %427 = vmatpush2.bf16.msra.mxu0 0
    %428 = vmatprep.subr.bf16.mxu0 0
    %429 = vmatpush2.bf16.msra.mxu0 0
    %430 = vmatprep.subr.bf16.mxu0 0
    %431 = vmatpush2.bf16.msra.mxu0 0
    %432 = vmatprep.mubr.bf16.mxu0 0
    %433 = vmatmul.mubr.bf16.gmra.mxu0 %v398
    %v434 = vpop.f32.mrf.mxu0
    %v435 = vadd.f32 %v371, %v434
    %v436 = vpop.f32.mrf.mxu0
    %v437 = vpop.f32.mrf.mxu0
    %v438 = vpop.f32.mrf.mxu0
    %439 = vdwg.mxu0
    %vm440 = vcmp.gt.f32.partialorder %v435, 0.0
    %v441 = vmul.f32 %v435, 0.01
    %v442 = vsel %vm440, %v435, %v441
    %v443 = vpack.c.bf16 %v442, %v442
    %v444 = vld [vmem:[%s9] sm:$0xf]
    %v445 = vld [vmem:[%s9 + $0x4] sm:$0xf]
    %v446 = vld [vmem:[%s9 + $0x8] sm:$0xf]
    %v447 = vld [vmem:[%s9 + $0xc] sm:$0xf]
    %v448 = vld [vmem:[%s10] sm:$0x1]
    %v450 = vlaneseq
    %v451 = vshrl.u32 %v450, 7
    %v452 = vsub.s32 0, %v451
    %v453 = vrot.slane %v448, %v452
    %v459 = vunpack.c.l.b16 %v444
    %v460 = vunpack.c.l.b16 %v445
    %v461 = vunpack.c.l.b16 %v446
    %v462 = vunpack.c.l.b16 %v447
    %v463 = vpack.c.b16 %v460, %v459
    %v464 = vpack.c.b16 %v462, %v461
    %vm467 = vcmask 261120
    %v469 = vsel %vm467, %v443, 0
    %471 = vmatprep.subr.bf16.mxu0 0
    %472 = vmatpush1.bf16.msra.mxu0 0
    %473 = vmatprep.subr.bf16.mxu0 0
    %474 = vmatpush1.bf16.msra.mxu0 0
    %475 = vmatprep.subr.bf16.mxu0 0
    %476 = vmatpush1.bf16.msra.mxu0 0
    %477 = vmatprep.subr.bf16.mxu0 0
    %478 = vmatpush1.bf16.msra.mxu0 0
    %479 = vmatprep.subr.bf16.mxu0 0
    %480 = vmatpush1.bf16.msra.mxu0 0
    %481 = vmatprep.subr.bf16.mxu0 0
    %482 = vmatpush1.bf16.msra.mxu0 0
    %483 = vmatprep.subr.bf16.mxu0 0
    %484 = vmatpush1.bf16.msra.mxu0 %v464
    %485 = vmatprep.subr.bf16.mxu0 0
    %486 = vmatpush1.bf16.msra.mxu0 %v463
    %487 = vmatprep.subr.bf16.mxu0 0
    %488 = vmatpush2.bf16.msra.mxu0 0
    %489 = vmatprep.subr.bf16.mxu0 0
    %490 = vmatpush2.bf16.msra.mxu0 0
    %491 = vmatprep.subr.bf16.mxu0 0
    %492 = vmatpush2.bf16.msra.mxu0 0
    %493 = vmatprep.subr.bf16.mxu0 0
    %494 = vmatpush2.bf16.msra.mxu0 0
    %495 = vmatprep.subr.bf16.mxu0 0
    %496 = vmatpush2.bf16.msra.mxu0 0
    %497 = vmatprep.subr.bf16.mxu0 0
    %498 = vmatpush2.bf16.msra.mxu0 0
    %499 = vmatprep.subr.bf16.mxu0 0
    %500 = vmatpush2.bf16.msra.mxu0 0
    %501 = vmatprep.subr.bf16.mxu0 0
    %502 = vmatpush2.bf16.msra.mxu0 0
    %503 = vmatprep.mubr.bf16.mxu0 0
    %504 = vmatmul.mubr.bf16.gmra.mxu0 %v469
    %v505 = vpop.f32.mrf.mxu0
    %v506 = vadd.f32 %v453, %v505
    %v507 = vpop.f32.mrf.mxu0
    %v508 = vpop.f32.mrf.mxu0
    %v509 = vpop.f32.mrf.mxu0
    %510 = vdwg.mxu0
    %511 = vmax.xlane.f32.xlu0 %v506
    %v512 = vpop.xlane.xlu0 %511
    %v513 = vsub.f32 %v506, %v512
    %v514 = vmul.f32 %v513, 1.442695
    %v515 = vpow.pop %v514
    %516 = vadd.xlane.f32.xlu0 %v515
    %v517 = vpop.xlane.xlu0 %516
    %v518 = vrcp.pop %v517
    %v519 = vmul.f32 %v515, %v518
    %520 = vst [vmem:[#allocation2] sm:$0xff] %v519
    // Predicated region
    $region46: #{tpu_custom_call.1} parent=1 // pred_check
      _
    $region47: #{tpu_custom_call.1} parent=1 // pred_check_branch
      %522 = sbr.rel (0) target = $region49
    $region48: #{tpu_custom_call.1} parent=1 // pred_region
      %s524 = ssub.s32 128, 128
      %525 = vsyncadd [#allocation3], %s524
      %s527 = sshll.u32 [#allocation2], 4
      %s528 = int_to_ptr.vmem [resolvable:$true] %s527
      %530 = dma.vmem_to_hbm [thread:$0]  %s528, 128, %s11, [#allocation3]
    $region49: #{tpu_custom_call.1} parent=1 // pred_fallthru
      _
    // Predicated region
    $region50: #{tpu_custom_call.1} parent=1 // pred_check
      _
    $region51: #{tpu_custom_call.1} parent=1 // pred_check_branch
      %532 = sbr.rel (0) target = $region53
    $region52: #{tpu_custom_call.1} parent=1 // pred_region
      %533 = dma.done [#allocation3], 128
    $region53: #{tpu_custom_call.1} parent=1 // pred_fallthru
      _
    %534 = vsyncpa [#allocation3], 1

</llo_original>
